<compile_context>
chip_gen: v6e
topology: v6e:2x2x1
jax: 0.10.0
libtpu: 0.0.40
codegen_flags: <defaults>
</compile_context>

<pallas_src>
import functools
import math

import jax
import jax.numpy as jnp
from jax.experimental import pallas as pl
from jax.experimental.pallas import tpu as pltpu


def _round_up(a: int, m: int) -> int:
    return ((a + m - 1) // m) * m


def _vmem_capacity_bytes() -> int:
    """Per-core VMEM capacity; conservative 64 MiB (v7x) fallback."""
    try:
        cap = getattr(pltpu.get_tpu_info(), "vmem_capacity_bytes", None)
        if cap:
            return int(cap)
    except Exception:
        pass
    return 64 << 20


# ---------------------------------------------------------------------------
# Kernels
# ---------------------------------------------------------------------------
def _single_block_kernel(*refs, weight_factor, use_bias, act):
    """Whole-problem-in-VMEM path for tiny layers (no grid, no padding)."""
    if use_bias:
        x_ref, w_ref, b_ref, o_ref = refs
    else:
        x_ref, w_ref, o_ref = refs
        b_ref = None
    y = jnp.dot(x_ref[...], w_ref[...],
                preferred_element_type=jnp.float32) * weight_factor
    if use_bias:
        y = y + b_ref[...]
    o_ref[...] = act(y).astype(o_ref.dtype)


def _tiled_kernel(*refs, weight_factor, use_bias, act):
    """(M, N, K)-tiled matmul with resident f32 accumulator.

    refs = (x[tm,tk], w_t[tk,tn], [bias[1,tn]], out[tm,tn], acc[tm,tn])
    """
    if use_bias:
        x_ref, w_ref, b_ref, o_ref, acc_ref = refs
    else:
        x_ref, w_ref, o_ref, acc_ref = refs
        b_ref = None
    k = pl.program_id(2)

    @pl.when(k == 0)
    def _init():
        acc_ref[...] = jnp.zeros_like(acc_ref)

    # Weight was pre-transposed once at init -> plain (tm,tk)@(tk,tn) MXU path,
    # no in-kernel transpose.
    acc_ref[...] += jnp.dot(x_ref[...], w_ref[...],
                            preferred_element_type=jnp.float32)

    @pl.when(k == pl.num_programs(2) - 1)
    def _finalize():
        y = acc_ref[...] * weight_factor
        if use_bias:
            y = y + b_ref[...]
        o_ref[...] = act(y).astype(o_ref.dtype)   # act must be elementwise


# ---------------------------------------------------------------------------
# Layer (init-time parameter prep + forward dispatch)
# ---------------------------------------------------------------------------
class WeightActLayer:
    """Pallas analogue of the PyTorch WeightActLayer (forward pass only)."""

    def __init__(self, weight, act, weight_factor, bias=None, use_bias=False,
                 *, compute_dtype=jnp.bfloat16,
                 tm_max=512, tn_max=512, tk_max=2048):
        d_out, d_in = weight.shape
        if use_bias:
            assert bias is not None and tuple(bias.shape) == (d_out,)
        self.d_in, self.d_out = int(d_in), int(d_out)
        self.act = act                                  # elementwise only
        self.use_bias = bool(use_bias)
        # Matches module semantics; static Python float (recompile if changed).
        self.wf = float(weight_factor) / math.sqrt(d_in)
        self.compute_dtype = compute_dtype
        self.tm_max = int(tm_max)

        # ---- N plan: never pad N (would inflate streamed weight bytes) ----
        if d_out <= tn_max:
            self.tn = d_out                             # one full-width N tile
        else:
            d128 = _round_up(d_out, 128)
            nn = pl.cdiv(d128, tn_max)
            tn = _round_up(pl.cdiv(d128, nn), 128)
            self.tn = min(tn, (d_out // 128) * 128)

        # ---- K plan: K tiles must cover the weight exactly (zero-padded) ----
        if d_in <= tk_max:
            self.tk, self.d_in_p = d_in, d_in           # single K tile, no pad
        else:
            d128 = _round_up(d_in, 128)
            nk = pl.cdiv(d128, tk_max)
            self.tk = _round_up(pl.cdiv(d128, nk), 128)
            self.d_in_p = nk * self.tk

        # ---- one-time parameter prep (nothing weight-side happens per call) ----
        w_t = jnp.swapaxes(jnp.asarray(weight), 0, 1).astype(compute_dtype)  # (d_in, d_out)
        pad_k = self.d_in_p - d_in
        self.w_t = jnp.pad(w_t, ((0, pad_k), (0, 0))) if pad_k else w_t
        self.b2 = (jnp.asarray(bias, jnp.float32).reshape(1, d_out)
                   if use_bias else None)

        # ---- tiny-layer bypass (no padding, no grid, single block) ----
        self.small_ok = (d_in <= 512 and d_out <= 512)
        self.w_small = w_t if self.small_ok else None

    # -- forward ------------------------------------------------------------
    def __call__(self, x):
        assert x.shape[-1] == self.d_in
        lead = x.shape[:-1]
        x2 = x.reshape(-1, self.d_in)
        B = x2.shape[0]
        if self.small_ok and B <= 1024:
            out = self._small_call(x2)
        else:
            out = self._tiled_call(x2)
        return out.reshape(*lead, self.d_out)

    def _small_call(self, x2):
        B = x2.shape[0]
        kernel = functools.partial(_single_block_kernel, weight_factor=self.wf,
                                   use_bias=self.use_bias, act=self.act)
        args = [x2.astype(self.compute_dtype), self.w_small]
        if self.use_bias:
            args.append(self.b2)
        return pl.pallas_call(
            kernel,
            out_shape=jax.ShapeDtypeStruct((B, self.d_out), jnp.float32),
        )(*args)

    def _tiled_call(self, x2):
        B = x2.shape[0]
        d_in, d_out, d_in_p = self.d_in, self.d_out, self.d_in_p
        tk, tn = self.tk, self.tn
        cdt = self.compute_dtype
        isz = jnp.dtype(cdt).itemsize

        # Per-call work on x only: dtype cast (+ rare ragged-K zero pad).
        x_c = x2.astype(cdt)
        if d_in_p != d_in:
            # TODO(synk): mask the ragged last K tile in-kernel to avoid this copy.
            x_c = jnp.pad(x_c, ((0, 0), (0, d_in_p - d_in)))

        # M tile grows with B so the weight is re-streamed only ceil(B/tm) times.
        tm = min(self.tm_max, _round_up(B, 8))
        if tm > B:
            tm = B                                       # full-dim sublane block
        grid_m, grid_n = pl.cdiv(B, tm), pl.cdiv(d_out, tn)

        # v7x has 2 TensorCores: ensure the "parallel" axes have >= 2 blocks.
        if grid_m * grid_n == 1:
            if d_out >= 256:
                tn = max(128, ((tn // 2) // 128) * 128)
                grid_n = pl.cdiv(d_out, tn)
            elif B >= 16:
                tm = min(B, max(8, _round_up(B // 2, 8)))
                grid_m = pl.cdiv(B, tm)

        # Generation-aware VMEM budget (v7x = 64 MiB/core, v5e/v6e = 128 MiB).
        cap = _vmem_capacity_bytes()
        budget = cap * 3 // 4

        def _foot(tm_, tn_):
            return (2 * tm_ * tk * isz           # x   (double-buffered)
                    + 2 * tk * tn_ * isz         # W^T (double-buffered)
                    + 2 * tn_ * 4                # bias
                    + 2 * tm_ * tn_ * 4          # out (double-buffered, f32)
                    + tm_ * tn_ * 4)             # f32 accumulator

        while _foot(tm, tn) > budget and tm > 64:
            tm = max(64, _round_up(tm // 2, 8))
            grid_m = pl.cdiv(B, tm)
        vmem_limit = int(min(cap * 9 // 10,
                             max(32 << 20, _foot(tm, tn) + (4 << 20))))

        grid = (grid_m, grid_n, d_in_p // tk)

        in_specs = [
            pl.BlockSpec((tm, tk), lambda i, j, k: (i, k)),   # x tile
            # NOTE: add pipeline_mode=pl.Buffered(3) here if profiling shows
            # exposed weight-DMA waits at the k-step boundary.
            pl.BlockSpec((tk, tn), lambda i, j, k: (k, j)),   # W^T tile
        ]
        args = [x_c, self.w_t]
        if self.use_bias:
            in_specs.append(pl.BlockSpec((1, tn), lambda i, j, k: (0, j)))
            args.append(self.b2)

        cost = pl.CostEstimate(
            flops=2 * B * d_in * d_out,
            transcendentals=B * d_out,
            bytes_accessed=(isz * (B * d_in_p + grid_m * d_in_p * d_out)
                            + 4 * (B * d_out + d_out)),
        )

        kernel = functools.partial(_tiled_kernel, weight_factor=self.wf,
                                   use_bias=self.use_bias, act=self.act)

        return pl.pallas_call(
            kernel,
            out_shape=jax.ShapeDtypeStruct((B, d_out), jnp.float32),  # unpadded
            grid_spec=pltpu.PrefetchScalarGridSpec(
                num_scalar_prefetch=0,
                grid=grid,
                in_specs=in_specs,
                out_specs=pl.BlockSpec((tm, tn), lambda i, j, k: (i, j)),
                scratch_shapes=[pltpu.VMEM((tm, tn), jnp.float32)],
            ),
            compiler_params=pltpu.CompilerParams(
                dimension_semantics=("parallel", "parallel", "arbitrary"),
                vmem_limit_bytes=vmem_limit,
            ),
            cost_estimate=cost,
        )(*args)


if __name__ == "__main__":
    key = jax.random.PRNGKey(0)
    k1, k2, k3, k4, k5, k6 = jax.random.split(key, 6)

    # ---- 1) tiny module-scale layer: single-block path, f32 compute ----
    B, d_in, d_out = 8, 32, 16
    x = jax.random.normal(k1, (B, d_in), jnp.float32)
    w = jax.random.normal(k2, (d_out, d_in), jnp.float32)   # stand-in for f64 normal_(0,1) init
    b = jax.random.normal(k3, (d_out,), jnp.float32)

    layer = WeightActLayer(w, jnp.tanh, 1.0, bias=b, use_bias=True,
                           compute_dtype=jnp.float32)
    out = jax.block_until_ready(layer(x))
    wf = 1.0 / math.sqrt(d_in)
    ref = jnp.tanh(wf * (x @ w.T) + b[None, :])
    assert out.shape == (B, d_out)
    assert jnp.allclose(out, ref, atol=1e-4, rtol=1e-4)

    # ---- 2) larger layer: tiled bf16 path (grid over N and K, f32 accumulate) ----
    B2, d_in2, d_out2 = 200, 2304, 384
    x2 = jax.random.normal(k4, (B2, d_in2), jnp.float32)
    w2 = jax.random.normal(k5, (d_out2, d_in2), jnp.float32)
    b2 = jax.random.normal(k6, (d_out2,), jnp.float32)

    layer2 = WeightActLayer(w2, jnp.tanh, 1.0, bias=b2, use_bias=True)  # default bf16
    out2 = jax.block_until_ready(layer2(x2))
    wf2 = 1.0 / math.sqrt(d_in2)
    xb = x2.astype(jnp.bfloat16).astype(jnp.float32)
    wb = w2.astype(jnp.bfloat16).astype(jnp.float32)
    ref2 = jnp.tanh(wf2 * (xb @ wb.T) + b2[None, :])
    assert out2.shape == (B2, d_out2)
    assert jnp.allclose(out2, ref2, atol=5e-3, rtol=5e-3)

    print("KERNEL_OK")
</pallas_src>

<mosaic_0001>
module attributes {stable_mosaic.version = 11 : i64} {
  func.func @_single_block_kernel(%arg0: memref<8x32xf32, #tpu.memory_space<vmem>>, %arg1: memref<32x16xf32, #tpu.memory_space<vmem>>, %arg2: memref<1x16xf32, #tpu.memory_space<vmem>>, %arg3: memref<8x16xf32, #tpu.memory_space<vmem>>) attributes {dimension_semantics = [], scalar_prefetch = 0 : i64, scratch_operands = 0 : i64, tpu.core_type = #tpu.core_type<tc>} {
    %c0 = arith.constant 0 : index
    %c0_0 = arith.constant 0 : index
    %0 = vector.load %arg0[%c0, %c0_0] : memref<8x32xf32, #tpu.memory_space<vmem>>, vector<8x32xf32>
    %c0_1 = arith.constant 0 : index
    %c0_2 = arith.constant 0 : index
    %1 = vector.load %arg1[%c0_1, %c0_2] : memref<32x16xf32, #tpu.memory_space<vmem>>, vector<32x16xf32>
    %cst = arith.constant dense<0.000000e+00> : vector<8x16xf32>
    %2 = tpu.matmul %0, %1, %cst {dimension_numbers = #tpu.dot_dimension_numbers<[1], [0], [0], [1], [0, 0, 1, 1], [], []>} : vector<8x32xf32>, vector<32x16xf32>, vector<8x16xf32> -> vector<8x16xf32>
    %cst_3 = arith.constant 0.176776692 : f32
    %3 = vector.broadcast %cst_3 : f32 to vector<8x16xf32>
    %4 = arith.mulf %2, %3 : vector<8x16xf32>
    %c0_4 = arith.constant 0 : index
    %c0_5 = arith.constant 0 : index
    %5 = vector.load %arg2[%c0_4, %c0_5] : memref<1x16xf32, #tpu.memory_space<vmem>>, vector<1x16xf32>
    %6 = vector.broadcast %5 : vector<1x16xf32> to vector<8x16xf32>
    %7 = arith.addf %4, %6 : vector<8x16xf32>
    %8 = math.tanh %7 : vector<8x16xf32>
    %c0_6 = arith.constant 0 : index
    %c0_7 = arith.constant 0 : index
    %9 = vector.load %arg3[%c0_6, %c0_7] : memref<8x16xf32, #tpu.memory_space<vmem>>, vector<8x16xf32>
    tpu.vector_store %arg3[%c0_6, %c0_7], %8 {strides = array<i32>} : memref<8x16xf32, #tpu.memory_space<vmem>>, vector<8x16xf32>,
    return
  }
}

</mosaic_0001>

<llo_original>
// kernel: tpu_custom_call.1
$region0: #{tpu_custom_call.1}
  #allocation0 [shape = 'u32[]', space=smem, size = 0x4, offset = 0x4, fixed_abs, tag = 'smem constant byte address 0x4 - core index']
  #allocation1 [shape = 'u32[144,128]{1,0:T(1,128)}', space=vmem, size = 0x12000, scoped, tag = 'internal scratch']
  %s0 = inlined_call_operand.vmem [shape: f32[8,32], index: 0, kind: input, shape index: {}]
  %s1 = inlined_call_operand.vmem [shape: f32[32,16], index: 1, kind: input, shape index: {}]
  %s2 = inlined_call_operand.vmem [shape: f32[1,16], index: 2, kind: input, shape index: {}]
  %s3 = inlined_call_operand.hbm [shape: f32[8,16], index: 3, kind: output, shape index: {}]
  %s4 = sld [smem:[#allocation0]]
  $region22: #{tpu_custom_call.1} parent=0
    _
  %s6 = ssub.s32 1, %s4
  %s7 = scalar_select 0, %s6, %s4
  $region1: #{tpu_custom_call.1} parent=0
    #allocation2 [shape = 'u8[4096]{0}', space=vmem, size = 0x1000, scoped, tag = 'output window, operand 0, single buffered']
    #allocation3 [shape = 's32[1]{0}', space=sflag, size = 0x4, scoped, tag = 'scoped memory for tpu_custom_call.1']
    %8 = vsyncpa [#allocation3], 0
    // Predicated region
    $region2: #{tpu_custom_call.1} parent=1 // pred_check
      _
    $region3: #{tpu_custom_call.1} parent=1 // pred_check_branch
      %10 = sbr.rel (0) target = $region5
    $region4: #{tpu_custom_call.1} parent=1 // pred_region
      _
    $region5: #{tpu_custom_call.1} parent=1 // pred_fallthru
      _
    // Predicated region
    $region6: #{tpu_custom_call.1} parent=1 // pred_check
      _
    $region7: #{tpu_custom_call.1} parent=1 // pred_check_branch
      %12 = sbr.rel (0) target = $region9
    $region8: #{tpu_custom_call.1} parent=1 // pred_region
      _
    $region9: #{tpu_custom_call.1} parent=1 // pred_fallthru
      _
    // Predicated region
    $region10: #{tpu_custom_call.1} parent=1 // pred_check
      _
    $region11: #{tpu_custom_call.1} parent=1 // pred_check_branch
      %14 = sbr.rel (0) target = $region13
    $region12: #{tpu_custom_call.1} parent=1 // pred_region
      _
    $region13: #{tpu_custom_call.1} parent=1 // pred_fallthru
      _
    %v15 = vld [vmem:[%s0] sm:$0xff]
    %v16 = vld [vmem:[%s1] sm:$0xff]
    %v17 = vld [vmem:[%s1 + $0x8] sm:$0xff]
    %v18 = vld [vmem:[%s1 + $0x10] sm:$0xff]
    %v19 = vld [vmem:[%s1 + $0x18] sm:$0xff]
    %vm20 = vcmask 261120
    %v22 = vsel %vm20, %v15, 0
    %24 = vmatprep.subr.mxu0 0.0
    %25 = vmatpush1.msra.mxu0 0.0
    %26 = vmatprep.subr.mxu0 0.0
    %27 = vmatpush1.msra.mxu0 0.0
    %28 = vmatprep.subr.mxu0 0.0
    %29 = vmatpush1.msra.mxu0 0.0
    %30 = vmatprep.subr.mxu0 0.0
    %31 = vmatpush1.msra.mxu0 0.0
    %32 = vmatprep.subr.mxu0 0.0
    %33 = vmatpush1.msra.mxu0 0.0
    %34 = vmatprep.subr.mxu0 0.0
    %35 = vmatpush1.msra.mxu0 0.0
    %36 = vmatprep.subr.mxu0 0.0
    %37 = vmatpush1.msra.mxu0 0.0
    %38 = vmatprep.subr.mxu0 0.0
    %39 = vmatpush1.msra.mxu0 0.0
    %40 = vmatprep.subr.mxu0 0.0
    %41 = vmatpush1.msra.mxu0 0.0
    %42 = vmatprep.subr.mxu0 0.0
    %43 = vmatpush1.msra.mxu0 0.0
    %44 = vmatprep.subr.mxu0 0.0
    %45 = vmatpush1.msra.mxu0 0.0
    %46 = vmatprep.subr.mxu0 0.0
    %47 = vmatpush1.msra.mxu0 0.0
    %48 = vmatprep.subr.mxu0 0.0
    %49 = vmatpush1.msra.mxu0 %v19
    %50 = vmatprep.subr.mxu0 0.0
    %51 = vmatpush1.msra.mxu0 %v18
    %52 = vmatprep.subr.mxu0 0.0
    %53 = vmatpush1.msra.mxu0 %v17
    %54 = vmatprep.subr.mxu0 0.0
    %55 = vmatpush1.msra.mxu0 %v16
    %56 = vmatprep.subr.mxu0 0.0
    %57 = vmatpush2.msra.mxu0 0.0
    %58 = vmatprep.subr.mxu0 0.0
    %59 = vmatpush2.msra.mxu0 0.0
    %60 = vmatprep.subr.mxu0 0.0
    %61 = vmatpush2.msra.mxu0 0.0
    %62 = vmatprep.subr.mxu0 0.0
    %63 = vmatpush2.msra.mxu0 0.0
    %64 = vmatprep.subr.mxu0 0.0
    %65 = vmatpush2.msra.mxu0 0.0
    %66 = vmatprep.subr.mxu0 0.0
    %67 = vmatpush2.msra.mxu0 0.0
    %68 = vmatprep.subr.mxu0 0.0
    %69 = vmatpush2.msra.mxu0 0.0
    %70 = vmatprep.subr.mxu0 0.0
    %71 = vmatpush2.msra.mxu0 0.0
    %72 = vmatprep.subr.mxu0 0.0
    %73 = vmatpush2.msra.mxu0 0.0
    %74 = vmatprep.subr.mxu0 0.0
    %75 = vmatpush2.msra.mxu0 0.0
    %76 = vmatprep.subr.mxu0 0.0
    %77 = vmatpush2.msra.mxu0 0.0
    %78 = vmatprep.subr.mxu0 0.0
    %79 = vmatpush2.msra.mxu0 0.0
    %80 = vmatprep.subr.mxu0 0.0
    %81 = vmatpush2.msra.mxu0 0.0
    %82 = vmatprep.subr.mxu0 0.0
    %83 = vmatpush2.msra.mxu0 0.0
    %84 = vmatprep.subr.mxu0 0.0
    %85 = vmatpush2.msra.mxu0 0.0
    %86 = vmatprep.subr.mxu0 0.0
    %87 = vmatpush2.msra.mxu0 0.0
    %88 = vmatprep.mubr.f32.mxu0 0.0
    %89 = vmatmul.mubr.f32.gmra.mxu0 %v22
    %v90 = vpop.f32.mrf.mxu0
    %v91 = vadd.f32 0.0, %v90
    %v92 = vpop.f32.mrf.mxu0
    %93 = vdwg.mxu0
    %v94 = vmul.f32 %v91, 0.17677669
    %v95 = vld [vmem:[%s2] sm:$0x1]
    %v97 = vlaneseq
    %v98 = vshrl.u32 %v97, 7
    %v99 = vsub.s32 0, %v98
    %v100 = vrot.slane %v95, %v99
    %v102 = vadd.f32 %v94, %v100
    %v103 = vtanh.pop %v102
    %vm104 = vcmask 130048
    %105 = vst.msk [vmem:[#allocation2] sm:$0xff] %vm104, %v103
    // Predicated region
    $region14: #{tpu_custom_call.1} parent=1 // pred_check
      _
    $region15: #{tpu_custom_call.1} parent=1 // pred_check_branch
      %107 = sbr.rel (0) target = $region17
    $region16: #{tpu_custom_call.1} parent=1 // pred_region
      %s109 = ssub.s32 128, 128
      %110 = vsyncadd [#allocation3], %s109
      %s112 = sshll.u32 [#allocation2], 4
      %s113 = int_to_ptr.vmem [resolvable:$true] %s112
      %115 = dma.vmem_to_hbm [thread:$0]  %s113, 128, %s3, [#allocation3]
    $region17: #{tpu_custom_call.1} parent=1 // pred_fallthru
      _
    // Predicated region
    $region18: #{tpu_custom_call.1} parent=1 // pred_check
      _
    $region19: #{tpu_custom_call.1} parent=1 // pred_check_branch
      %117 = sbr.rel (0) target = $region21
    $region20: #{tpu_custom_call.1} parent=1 // pred_region
      %118 = dma.done [#allocation3], 128
    $region21: #{tpu_custom_call.1} parent=1 // pred_fallthru
      _
    %119 = vsyncpa [#allocation3], 1

</llo_original>
